<compile_context>
chip_gen: v6e
topology: v6e:2x2x1
jax: 0.10.0
libtpu: 0.0.40
codegen_flags: <defaults>
</compile_context>

<pallas_src>
import math

import jax
import jax.numpy as jnp
from jax.experimental import pallas as pl
from jax.experimental.pallas import tpu as pltpu


def _choose_tile_rows(n, c, tile_rows=None):
    """Rows per tile: ~1M logits elements, multiple of 8, never exceeding n."""
    if tile_rows is None:
        target_elems = 1 << 20               # 4 MiB f32 / 2 MiB bf16 per logits tile
        tile_rows = min(2048, max(8, target_elems // max(1, c)))
    tn = max(8, (int(tile_rows) // 8) * 8)
    if n >= 8:
        tn = min(tn, (n // 8) * 8)           # keep block rows <= array rows
    else:
        tn = n                               # tiny batch: one full (un-tiled) block
    return tn


def aals_loss(logits, targets, ca, tile_rows=None):
    """logits: (N, C) float (f32 or bf16); targets: (N,) int; ca: (N,) float.

    Returns the scalar AALS loss (matches the PyTorch module's forward).
    """
    n, c = logits.shape
    itemsize = jnp.dtype(logits.dtype).itemsize
    tn = _choose_tile_rows(n, c, tile_rows)
    num_tiles = pl.cdiv(n, tn)
    ragged = (n % tn) != 0

    inv_c = 1.0 / c
    log_inv_c = math.log(inv_c)

    targets2 = targets.reshape(n, 1).astype(jnp.int32)
    ca2 = ca.reshape(n, 1).astype(jnp.float32)

    def kernel(logits_ref, targets_ref, ca_ref, out_ref):
        x = logits_ref[...]                                          # (tn, C)
        # Row max in the input dtype (exact), then f32 for the stable exp path.
        m = jnp.max(x, axis=1, keepdims=True).astype(jnp.float32)    # (tn, 1)
        xf = x.astype(jnp.float32)                                   # fused into reductions
        lse = jnp.log(jnp.sum(jnp.exp(xf - m), axis=1, keepdims=True))   # (tn, 1)

        ca_r = ca_ref[...]                                           # (tn, 1) f32
        one_m_ca = 1.0 - ca_r
        base_w = one_m_ca * inv_c                                    # (tn, 1)
        col = jax.lax.broadcasted_iota(jnp.int32, (tn, c), 1)
        # Single fused weight: (1-ca)/C everywhere, +ca at the target class.
        w = jnp.where(col == targets_ref[...], base_w + ca_r, base_w)    # (tn, C)
        wx = jnp.sum(xf * w, axis=1, keepdims=True)                  # (tn, 1)

        # per_row = ca*loss_ce + (1-ca)*loss_kld, algebraically fused.
        per_row = lse + m + one_m_ca * log_inv_c - wx                # (tn, 1)

        if ragged:
            # Ragged last tile: rows beyond the true N hold garbage (possibly
            # inf/NaN) — select 0 for them before the tile reduction.
            row = jax.lax.broadcasted_iota(jnp.int32, (tn, 1), 0)
            valid = (pl.program_id(0) * tn + row) < n
            per_row = jnp.where(valid, per_row, 0.0)

        tile_sum = jnp.sum(per_row, axis=0, keepdims=True)           # (1, 1)
        out_ref[...] = jnp.broadcast_to(tile_sum, (8, 128))          # one aligned vreg

    cost = pl.CostEstimate(
        flops=7 * n * c,
        transcendentals=n * c + n,
        bytes_accessed=n * c * itemsize + n * 8 + num_tiles * 8 * 128 * 4,
    )

    partials = pl.pallas_call(
        kernel,
        out_shape=jax.ShapeDtypeStruct((num_tiles, 8, 128), jnp.float32),
        grid=(num_tiles,),
        in_specs=[
            pl.BlockSpec((tn, c), lambda i: (i, 0)),      # logits tile (streamed)
            pl.BlockSpec((tn, 1), lambda i: (i, 0)),      # targets tile
            pl.BlockSpec((tn, 1), lambda i: (i, 0)),      # ca tile
        ],
        out_specs=pl.BlockSpec((None, 8, 128), lambda i: (i, 0, 0)),  # per-tile partial sum
        compiler_params=pltpu.CompilerParams(
            dimension_semantics=("parallel",),            # megacore-shardable on v7x
            vmem_limit_bytes=48 * 1024 * 1024,            # safe on v5e/v6e/v7x
        ),
        cost_estimate=cost,
    )(logits, targets2, ca2)

    # Tiny final reduction over num_tiles scalars; divide by the true N.
    return jnp.sum(partials[:, 0, 0]) / n


def aals_loss_ref(logits, targets, ca):
    """Pure-JAX reference matching the PyTorch forward exactly."""
    logits = logits.astype(jnp.float32)
    n, c = logits.shape
    log_preds = jax.nn.log_softmax(logits, axis=1)
    onehot = jax.nn.one_hot(targets, c, dtype=jnp.float32)
    loss_ce = jnp.sum(-onehot * log_preds, axis=1)
    uni = 1.0 / c
    loss_kld = jnp.sum(uni * (jnp.log(uni) - log_preds), axis=1)
    return jnp.mean(ca * loss_ce + (1.0 - ca) * loss_kld)


if __name__ == "__main__":
    key = jax.random.PRNGKey(0)
    k1, k2, k3 = jax.random.split(key, 3)

    # Small demo shapes (module-consistent): batch=8, classes=32.
    N, C = 8, 32
    logits = jax.random.normal(k1, (N, C), dtype=jnp.float32)
    targets = jax.random.randint(k2, (N,), 0, C, dtype=jnp.int32)
    ca = jax.random.uniform(k3, (N,), dtype=jnp.float32)

    loss = aals_loss(logits, targets, ca)
    jax.block_until_ready(loss)
    ref = aals_loss_ref(logits, targets, ca)
    assert jnp.allclose(loss, ref, atol=1e-5, rtol=1e-5), (loss, ref)

    # Second check: multi-tile path with a ragged last tile (200 = 3*64 + 8),
    # exercised WITHOUT any wrapper-side padding of the logits.
    k4, k5, k6 = jax.random.split(k3, 3)
    N2, C2 = 200, 64
    logits2 = jax.random.normal(k4, (N2, C2), dtype=jnp.float32)
    targets2 = jax.random.randint(k5, (N2,), 0, C2, dtype=jnp.int32)
    ca2 = jax.random.uniform(k6, (N2,), dtype=jnp.float32)

    loss2 = aals_loss(logits2, targets2, ca2, tile_rows=64)   # grid = 4 tiles
    jax.block_until_ready(loss2)
    ref2 = aals_loss_ref(logits2, targets2, ca2)
    assert jnp.allclose(loss2, ref2, atol=1e-5, rtol=1e-5), (loss2, ref2)

    print("KERNEL_OK")
</pallas_src>

<mosaic_0001>
module attributes {stable_mosaic.version = 11 : i64} {
  func.func @kernel(%arg0: i32, %arg1: memref<8x32xf32, #tpu.memory_space<vmem>>, %arg2: memref<8x1xi32, #tpu.memory_space<vmem>>, %arg3: memref<8x1xf32, #tpu.memory_space<vmem>>, %arg4: memref<1x8x128xf32, #tpu.memory_space<vmem>>) attributes {dimension_semantics = [#tpu.dimension_semantics<parallel>], iteration_bounds = array<i64: 1>, scalar_prefetch = 0 : i64, scratch_operands = 0 : i64, tpu.core_type = #tpu.core_type<tc>, window_params = [{transform_indices = @transform_0, window_bounds = array<i64: 8, 32>}, {transform_indices = @transform_1, window_bounds = array<i64: 8, 1>}, {transform_indices = @transform_2, window_bounds = array<i64: 8, 1>}, {transform_indices = @transform_3, window_bounds = array<i64: 1, 8, 128>}]} {
    %c0 = arith.constant 0 : index
    %c0_0 = arith.constant 0 : index
    %0 = vector.load %arg1[%c0, %c0_0] : memref<8x32xf32, #tpu.memory_space<vmem>>, vector<8x32xf32>
    %cst = arith.constant dense<0xFF800000> : vector<8xf32>
    %1 = vector.multi_reduction <maximumf>, %0, %cst [1] : vector<8x32xf32> to vector<8xf32>
    %2 = vector.shape_cast %1 : vector<8xf32> to vector<8x1xf32>
    %3 = vector.broadcast %2 : vector<8x1xf32> to vector<8x32xf32>
    %4 = arith.subf %0, %3 : vector<8x32xf32>
    %5 = math.exp %4 : vector<8x32xf32>
    %cst_1 = arith.constant dense<0.000000e+00> : vector<8xf32>
    %6 = vector.multi_reduction <add>, %5, %cst_1 [1] : vector<8x32xf32> to vector<8xf32>
    %7 = vector.shape_cast %6 : vector<8xf32> to vector<8x1xf32>
    %8 = math.log %7 : vector<8x1xf32>
    %c0_2 = arith.constant 0 : index
    %c0_3 = arith.constant 0 : index
    %9 = vector.load %arg3[%c0_2, %c0_3] : memref<8x1xf32, #tpu.memory_space<vmem>>, vector<8x1xf32>
    %cst_4 = arith.constant 1.000000e+00 : f32
    %10 = vector.broadcast %cst_4 : f32 to vector<8x1xf32>
    %11 = arith.subf %10, %9 : vector<8x1xf32>
    %cst_5 = arith.constant 3.125000e-02 : f32
    %12 = vector.broadcast %cst_5 : f32 to vector<8x1xf32>
    %13 = arith.mulf %11, %12 : vector<8x1xf32>
    %14 = tpu.iota {dimensions = array<i32: 1>} : vector<8x32xi32>
    %c0_6 = arith.constant 0 : index
    %c0_7 = arith.constant 0 : index
    %15 = vector.load %arg2[%c0_6, %c0_7] : memref<8x1xi32, #tpu.memory_space<vmem>>, vector<8x1xi32>
    %16 = vector.broadcast %15 : vector<8x1xi32> to vector<8x32xi32>
    %17 = arith.cmpi eq, %14, %16 : vector<8x32xi32>
    %18 = arith.addf %13, %9 : vector<8x1xf32>
    %19 = vector.shape_cast %18 : vector<8x1xf32> to vector<8x1xf32>
    %20 = vector.broadcast %19 : vector<8x1xf32> to vector<8x32xf32>
    %21 = vector.shape_cast %13 : vector<8x1xf32> to vector<8x1xf32>
    %22 = vector.broadcast %21 : vector<8x1xf32> to vector<8x32xf32>
    %23 = arith.select %17, %20, %22 : vector<8x32xi1>, vector<8x32xf32>
    %24 = arith.mulf %0, %23 : vector<8x32xf32>
    %cst_8 = arith.constant dense<0.000000e+00> : vector<8xf32>
    %25 = vector.multi_reduction <add>, %24, %cst_8 [1] : vector<8x32xf32> to vector<8xf32>
    %26 = vector.shape_cast %25 : vector<8xf32> to vector<8x1xf32>
    %27 = arith.addf %8, %2 : vector<8x1xf32>
    %cst_9 = arith.constant -3.46573591 : f32
    %28 = vector.broadcast %cst_9 : f32 to vector<8x1xf32>
    %29 = arith.mulf %11, %28 : vector<8x1xf32>
    %30 = arith.addf %27, %29 : vector<8x1xf32>
    %31 = arith.subf %30, %26 : vector<8x1xf32>
    %cst_10 = arith.constant dense<0.000000e+00> : vector<1xf32>
    %32 = vector.multi_reduction <add>, %31, %cst_10 [0] : vector<8x1xf32> to vector<1xf32>
    %33 = vector.shape_cast %32 : vector<1xf32> to vector<1x1xf32>
    %34 = vector.shape_cast %33 : vector<1x1xf32> to vector<1x1xf32>
    %35 = vector.broadcast %34 : vector<1x1xf32> to vector<8x128xf32>
    %c0_11 = arith.constant 0 : index
    %c0_12 = arith.constant 0 : index
    %c0_13 = arith.constant 0 : index
    %36 = vector.load %arg4[%c0_11, %c0_12, %c0_13] : memref<1x8x128xf32, #tpu.memory_space<vmem>>, vector<1x8x128xf32>
    %37 = vector.shape_cast %36 : vector<1x8x128xf32> to vector<8x128xf32>
    %38 = vector.shape_cast %35 : vector<8x128xf32> to vector<1x8x128xf32>
    tpu.vector_store %arg4[%c0_11, %c0_12, %c0_13], %38 {strides = array<i32>} : memref<1x8x128xf32, #tpu.memory_space<vmem>>, vector<1x8x128xf32>,
    return
  }
  func.func @transform_0(%arg0: i32) -> (i32, i32) {
    %c0_i32 = arith.constant 0 : i32
    %c0_i32_0 = arith.constant 0 : i32
    return %arg0, %c0_i32 : i32, i32
  }
  func.func @transform_1(%arg0: i32) -> (i32, i32) {
    %c0_i32 = arith.constant 0 : i32
    %c0_i32_0 = arith.constant 0 : i32
    return %arg0, %c0_i32 : i32, i32
  }
  func.func @transform_2(%arg0: i32) -> (i32, i32) {
    %c0_i32 = arith.constant 0 : i32
    %c0_i32_0 = arith.constant 0 : i32
    return %arg0, %c0_i32 : i32, i32
  }
  func.func @transform_3(%arg0: i32) -> (i32, i32, i32) {
    %c0_i32 = arith.constant 0 : i32
    %c0_i32_0 = arith.constant 0 : i32
    %c0_i32_1 = arith.constant 0 : i32
    return %arg0, %c0_i32, %c0_i32_0 : i32, i32, i32
  }
}

</mosaic_0001>

<llo_original>
// kernel: tpu_custom_call.1
$region0: #{tpu_custom_call.1}
  #allocation0 [shape = 'u32[]', space=smem, size = 0x4, offset = 0x4, fixed_abs, tag = 'smem constant byte address 0x4 - core index']
  #allocation1 [shape = 'u32[144,128]{1,0:T(1,128)}', space=vmem, size = 0x12000, scoped, tag = 'internal scratch']
  %s0 = inlined_call_operand.vmem [shape: f32[8,32], index: 0, kind: input, shape index: {}]
  %s1 = inlined_call_operand.vmem [shape: s32[8,1], index: 1, kind: input, shape index: {}]
  %s2 = inlined_call_operand.vmem [shape: f32[8,1], index: 2, kind: input, shape index: {}]
  %s3 = inlined_call_operand.hbm [shape: f32[1,8,128], index: 3, kind: output, shape index: {}]
  %s4 = sld [smem:[#allocation0]]
  $region22: #{tpu_custom_call.1} parent=0
    _
  %s6 = ssub.s32 1, %s4
  %s7 = scalar_select 0, %s6, %s4
  $region1: #{tpu_custom_call.1} parent=0
    #allocation2 [shape = 'u8[4096]{0}', space=vmem, size = 0x1000, scoped, tag = 'output window, operand 0, single buffered']
    #allocation3 [shape = 's32[1]{0}', space=sflag, size = 0x4, scoped, tag = 'scoped memory for tpu_custom_call.1']
    %8 = vsyncpa [#allocation3], 0
    // Predicated region
    $region2: #{tpu_custom_call.1} parent=1 // pred_check
      _
    $region3: #{tpu_custom_call.1} parent=1 // pred_check_branch
      %10 = sbr.rel (0) target = $region5
    $region4: #{tpu_custom_call.1} parent=1 // pred_region
      _
    $region5: #{tpu_custom_call.1} parent=1 // pred_fallthru
      _
    // Predicated region
    $region6: #{tpu_custom_call.1} parent=1 // pred_check
      _
    $region7: #{tpu_custom_call.1} parent=1 // pred_check_branch
      %12 = sbr.rel (0) target = $region9
    $region8: #{tpu_custom_call.1} parent=1 // pred_region
      _
    $region9: #{tpu_custom_call.1} parent=1 // pred_fallthru
      _
    // Predicated region
    $region10: #{tpu_custom_call.1} parent=1 // pred_check
      _
    $region11: #{tpu_custom_call.1} parent=1 // pred_check_branch
      %14 = sbr.rel (0) target = $region13
    $region12: #{tpu_custom_call.1} parent=1 // pred_region
      _
    $region13: #{tpu_custom_call.1} parent=1 // pred_fallthru
      _
    %v15 = vld [vmem:[%s0] sm:$0xff]
    %vm16 = vcmask 261120
    %v17 = vsel %vm16, %v15, -inf
    %18 = vmax.xlane.f32.xlu0 %v17
    %v19 = vpop.xlane.xlu0 %18
    %v20 = vsub.f32 %v15, %v19
    %v21 = vmul.f32 %v20, 1.442695
    %v22 = vpow.pop %v21
    %v23 = vsel %vm16, %v22, 0.0
    %24 = vadd.xlane.f32.xlu0 %v23
    %v25 = vpop.xlane.xlu0 %24
    %v26 = vlog2.pop %v25
    %v27 = vmul.f32 %v26, 0.6931472
    %v28 = vld [vmem:[%s2] sm:$0xff]
    %v29 = vsub.f32 1.0, %v28
    %v30 = vmul.f32 %v29, 0.03125
    %v31 = vlaneseq
    %v32 = vand.u32 %v31, 127
    %v33 = vld [vmem:[%s1] sm:$0xff]
    %34 = vset.pattern.permute.xlu0 0
    %35 = vperm.xlu0 %34, %v33
    %v36 = vpop.permute.xlu0 %35
    %vm37 = vcmp.eq.s32.totalorder %v32, %v36
    %v38 = vadd.f32 %v30, %v28
    %40 = vset.pattern.permute.xlu0 0
    %41 = vperm.xlu0 %40, %v38
    %v42 = vpop.permute.xlu0 %41
    %45 = vset.pattern.permute.xlu0 0
    %46 = vperm.xlu0 %45, %v30
    %v47 = vpop.permute.xlu0 %46
    %v49 = vsel %vm37, %v42, %v47
    %v50 = vmul.f32 %v15, %v49
    %v51 = vsel %vm16, %v50, 0.0
    %52 = vadd.xlane.f32.xlu0 %v51
    %v53 = vpop.xlane.xlu0 %52
    %v54 = vadd.f32 %v27, %v19
    %v55 = vmul.f32 %v29, -3.465736
    %v56 = vadd.f32 %v54, %v55
    %v57 = vsub.f32 %v56, %v53
    %vm58 = vcmask 7168
    %v59 = vsel %vm58, %v57, 0.0
    %v60 = vrot.slane %v59, 4
    %v61 = vadd.f32 %v59, %v60
    %v62 = vrot.slane %v61, 2
    %v63 = vadd.f32 %v61, %v62
    %v64 = vrot.slane %v63, 1
    %v65 = vadd.f32 %v63, %v64
    %67 = vset.pattern.permute.xlu0 0
    %68 = vperm.xlu0 %67, %v65
    %v69 = vpop.permute.xlu0 %68
    %71 = vst [vmem:[#allocation2] sm:$0xff] %v69
    // Predicated region
    $region14: #{tpu_custom_call.1} parent=1 // pred_check
      _
    $region15: #{tpu_custom_call.1} parent=1 // pred_check_branch
      %73 = sbr.rel (0) target = $region17
    $region16: #{tpu_custom_call.1} parent=1 // pred_region
      %s75 = ssub.s32 128, 128
      %76 = vsyncadd [#allocation3], %s75
      %s78 = sshll.u32 [#allocation2], 4
      %s79 = int_to_ptr.vmem [resolvable:$true] %s78
      %81 = dma.vmem_to_hbm [thread:$0]  %s79, 128, %s3, [#allocation3]
    $region17: #{tpu_custom_call.1} parent=1 // pred_fallthru
      _
    // Predicated region
    $region18: #{tpu_custom_call.1} parent=1 // pred_check
      _
    $region19: #{tpu_custom_call.1} parent=1 // pred_check_branch
      %83 = sbr.rel (0) target = $region21
    $region20: #{tpu_custom_call.1} parent=1 // pred_region
      %84 = dma.done [#allocation3], 128
    $region21: #{tpu_custom_call.1} parent=1 // pred_fallthru
      _
    %85 = vsyncpa [#allocation3], 1

</llo_original>
